<compile_context>
chip_gen: v7x
topology: tpu7x:2x2x1
jax: 0.10.0
libtpu: 0.0.40
codegen_flags: <defaults>
</compile_context>

<pallas_src>
import functools

import jax
import jax.numpy as jnp
import numpy as np
from jax.experimental import pallas as pl
from jax.experimental.pallas import tpu as pltpu

EPS = 1e-6                     # norm_layer = partial(nn.LayerNorm, eps=1e-06)
_NEG_INF = -1e30               # softmax key-padding mask value (finite, no NaN risk)
# pl.reciprocal(approx=True) runs on the EUP (free slot) but deviates slightly
# from exact division; set False for bit-closer softmax denominators.
APPROX_SOFTMAX_RECIPROCAL = True


# ----------------------------------------------------------------------------
# Small helpers
# ----------------------------------------------------------------------------
def _layernorm(x, g, b):
    mu = jnp.mean(x, axis=-1, keepdims=True)
    var = jnp.mean((x - mu) ** 2, axis=-1, keepdims=True)
    return (x - mu) * jax.lax.rsqrt(var + EPS) * g + b


def _round_up(v, m):
    return ((v + m - 1) // m) * m


def _vmem_capacity_bytes():
    try:
        return int(pltpu.get_tpu_info().vmem_capacity_bytes)
    except Exception:
        return 64 * 1024 * 1024        # assume the smallest generation (v7x per-TC)


def _vmem_limit_bytes():
    cap = _vmem_capacity_bytes()
    return int(min(int(cap * 0.85), 112 * 1024 * 1024))


def _block_vmem_estimate(n_tok, d, chunk):
    """Rough per-grid-step VMEM footprint of the transformer block kernel."""
    f32, bf16 = 4, 2
    act = n_tok * d
    est = 0
    est += 2 * act * f32 * 2                      # x block + out block, double-buffered
    est += (3 * d * d + d * d) * bf16 * 2         # qkv + proj weights (2 buffers)
    est += 2 * d * chunk * bf16 * 2               # fc1/fc2 weight chunks (2 buffers)
    est += act * (bf16 + bf16 + f32)              # attn / xn2 / acc scratch
    est += n_tok * 3 * d * f32                    # qkv intermediate (f32 before cast)
    est += 2 * n_tok * n_tok * f32                # per-head scores + probs
    est += n_tok * chunk * f32                    # MLP hidden-chunk intermediate
    est += 2 * (1 << 20)                          # biases, norms, misc headroom
    return est


def _choose_mlp_chunk(n_tok, d, hidden, vmem_limit):
    """Prefer no chunking; else largest 256-aligned divisor of hidden (MXU-friendly
    on v6e/v7x), then 128-aligned, that fits the VMEM budget."""
    cands = [hidden]
    for align in (256, 128):
        if hidden % align == 0 or True:
            for k in range(hidden // align, 0, -1):
                c = k * align
                if c < hidden and hidden % c == 0 and c not in cands:
                    cands.append(c)
    for c in cands:
        if _block_vmem_estimate(n_tok, d, c) <= vmem_limit:
            return c
    return cands[-1]


# ----------------------------------------------------------------------------
# Kernels
# ----------------------------------------------------------------------------
def _embed_kernel(x_ref, w_ref, b_ref, cls_ref, pe_ref, o_ref, *, n_pad_rows):
    # x: (1, L, P) f32  w: (P, D) bf16  b/cls: (1, D) f32  pe: (1, L, D) f32
    x = x_ref[0].astype(jnp.bfloat16)
    emb = jnp.dot(x, w_ref[...], preferred_element_type=jnp.float32)
    emb = emb + b_ref[...] + pe_ref[0]                 # fused bias + pos_embed add
    L, D = emb.shape
    # Direct slab stores (no concat): cls token (its positional embedding is 0),
    # then the patch tokens, then zeroed padding rows.
    o_ref[0, 0:1, :] = cls_ref[...]
    o_ref[0, 1:1 + L, :] = emb
    if n_pad_rows > 0:
        o_ref[0, 1 + L:, :] = jnp.zeros((n_pad_rows, D), jnp.float32)


def _block_kernel(x_ref, g1_ref, b1_ref, wqkv_ref, bqkv_ref, wproj_ref, bproj_ref,
                  g2_ref, b2_ref, wfc1_ref, bfc1_ref, wfc2_ref, bfc2_ref,
                  *rest, num_heads, n_real, apply_final_norm):
    """One pre-norm transformer Block.

    Grid = (batch, mlp_hidden_chunks).  Attention + residual run at chunk 0;
    the MLP is accumulated chunk-by-chunk into an f32 VMEM scratch; the output
    block is written exactly once at the last chunk (with the encoder-final
    LayerNorm fused in for the last block).
    """
    if apply_final_norm:
        gfin_ref, bfin_ref, o_ref, attn_sc, xn2_sc, acc_sc = rest
    else:
        o_ref, attn_sc, xn2_sc, acc_sc = rest
        gfin_ref = bfin_ref = None

    c = pl.program_id(1)

    @pl.when(c == 0)
    def _attention_and_init():
        x = x_ref[0]                                   # (N, D) f32
        N, D = x.shape
        dh = D // num_heads
        scale = dh ** -0.5

        xn = _layernorm(x, g1_ref[...], b1_ref[...])
        qkv = jnp.dot(xn.astype(jnp.bfloat16), wqkv_ref[...],
                      preferred_element_type=jnp.float32) + bqkv_ref[...]
        qkv = qkv.astype(jnp.bfloat16)                 # single f32 -> bf16 cast

        if n_real < N:                                 # mask padded key columns
            key_idx = jax.lax.broadcasted_iota(jnp.int32, (N, N), 1)
            key_mask = key_idx < n_real
        else:
            key_mask = None

        for h in range(num_heads):                     # static unroll over heads
            sl = slice(h * dh, (h + 1) * dh)
            qh = qkv[:, sl]
            kh = qkv[:, D + h * dh:D + (h + 1) * dh]
            vh = qkv[:, 2 * D + h * dh:2 * D + (h + 1) * dh]
            # Scale applied to f32 scores == timm's q-scaling (same math).
            s = jax.lax.dot_general(qh, kh, (((1,), (1,)), ((), ())),
                                    preferred_element_type=jnp.float32) * scale
            if key_mask is not None:
                s = jnp.where(key_mask, s, _NEG_INF)
            s = s - jnp.max(s, axis=-1, keepdims=True)
            p = jnp.exp(s)
            denom = jnp.sum(p, axis=-1, keepdims=True)
            if APPROX_SOFTMAX_RECIPROCAL:
                p = p * pl.reciprocal(denom, approx=True)
            else:
                p = p / denom
            pv = jnp.dot(p.astype(jnp.bfloat16), vh,
                         preferred_element_type=jnp.float32)
            attn_sc[:, sl] = pv.astype(jnp.bfloat16)   # scatter to scratch, no concat

        # Single full-D-contraction projection matmul from the head scratch.
        attn = jnp.dot(attn_sc[...], wproj_ref[...],
                       preferred_element_type=jnp.float32) + bproj_ref[...]
        resid = x + attn
        xn2_sc[...] = _layernorm(resid, g2_ref[...], b2_ref[...]).astype(jnp.bfloat16)
        acc_sc[...] = resid + bfc2_ref[...]            # fc2 bias folded in once

    # ---- MLP hidden-dim chunk (runs on every grid step, including c == 0) ----
    h1 = jnp.dot(xn2_sc[...], wfc1_ref[...],
                 preferred_element_type=jnp.float32) + bfc1_ref[...]
    h1 = jax.nn.gelu(h1, approximate=False)            # exact erf GELU == nn.GELU
    acc_sc[...] += jnp.dot(h1.astype(jnp.bfloat16), wfc2_ref[...],
                           preferred_element_type=jnp.float32)

    @pl.when(c == pl.num_programs(1) - 1)
    def _finalize():
        out = acc_sc[...]
        if apply_final_norm:                            # fused encoder-final LayerNorm
            out = _layernorm(out, gfin_ref[...], bfin_ref[...])
        o_ref[0] = out                                  # single output-block write


# ----------------------------------------------------------------------------
# pallas_call wrappers
# ----------------------------------------------------------------------------
def patch_embed_call(x, w_t, b, cls_token, pos_embed, n_pad_total, vmem_limit):
    B, L, P = x.shape
    D = w_t.shape[1]
    if pos_embed.ndim == 2:
        pos_embed = pos_embed[None]
    pad_rows = n_pad_total - (L + 1)
    return pl.pallas_call(
        functools.partial(_embed_kernel, n_pad_rows=pad_rows),
        out_shape=jax.ShapeDtypeStruct((B, n_pad_total, D), jnp.float32),
        grid=(B,),
        in_specs=[pl.BlockSpec((1, L, P), lambda bi: (bi, 0, 0)),
                  pl.BlockSpec((P, D), lambda bi: (0, 0)),
                  pl.BlockSpec((1, D), lambda bi: (0, 0)),
                  pl.BlockSpec((1, D), lambda bi: (0, 0)),
                  pl.BlockSpec((1, L, D), lambda bi: (0, 0, 0))],   # batch-invariant PE
        out_specs=pl.BlockSpec((1, n_pad_total, D), lambda bi: (bi, 0, 0)),
        compiler_params=pltpu.CompilerParams(
            dimension_semantics=("parallel",),
            vmem_limit_bytes=vmem_limit),
    )(x, w_t, b, cls_token, pos_embed)


def transformer_block_call(x, bp, num_heads, n_real, *, final_norm=None,
                           mlp_chunk=None, vmem_limit=None):
    B, N, D = x.shape
    hidden = bp['fc1_w_t'].shape[1]
    if vmem_limit is None:
        vmem_limit = _vmem_limit_bytes()
    if mlp_chunk is None:
        mlp_chunk = _choose_mlp_chunk(N, D, hidden, vmem_limit)
    if mlp_chunk <= 0 or hidden % mlp_chunk != 0 or \
            (mlp_chunk != hidden and mlp_chunk % 128 != 0):
        mlp_chunk = hidden                              # no chunking fallback
    n_chunks = hidden // mlp_chunk

    def const(a):
        return pl.BlockSpec(a.shape, lambda bi, ci, _nd=a.ndim: (0,) * _nd)

    in_specs = [
        pl.BlockSpec((1, N, D), lambda bi, ci: (bi, 0, 0)),      # x
        const(bp['norm1_g']), const(bp['norm1_b']),
        const(bp['qkv_w_t']), const(bp['qkv_b']),
        const(bp['proj_w_t']), const(bp['proj_b']),
        const(bp['norm2_g']), const(bp['norm2_b']),
        pl.BlockSpec((D, mlp_chunk), lambda bi, ci: (0, ci)),    # fc1 weight chunk
        pl.BlockSpec((1, mlp_chunk), lambda bi, ci: (0, ci)),    # fc1 bias chunk
        pl.BlockSpec((mlp_chunk, D), lambda bi, ci: (ci, 0)),    # fc2 weight chunk
        const(bp['fc2_b']),
    ]
    args = [x, bp['norm1_g'], bp['norm1_b'], bp['qkv_w_t'], bp['qkv_b'],
            bp['proj_w_t'], bp['proj_b'], bp['norm2_g'], bp['norm2_b'],
            bp['fc1_w_t'], bp['fc1_b'], bp['fc2_w_t'], bp['fc2_b']]

    apply_final_norm = final_norm is not None
    if apply_final_norm:                                # only the last block streams these
        in_specs += [const(final_norm[0]), const(final_norm[1])]
        args += [final_norm[0], final_norm[1]]

    return pl.pallas_call(
        functools.partial(_block_kernel, num_heads=num_heads, n_real=n_real,
                          apply_final_norm=apply_final_norm),
        out_shape=jax.ShapeDtypeStruct((B, N, D), jnp.float32),
        grid=(B, n_chunks),
        in_specs=in_specs,
        out_specs=pl.BlockSpec((1, N, D), lambda bi, ci: (bi, 0, 0)),
        scratch_shapes=[pltpu.VMEM((N, D), jnp.bfloat16),   # per-head attention outputs
                        pltpu.VMEM((N, D), jnp.bfloat16),   # LN2(x + attn) in bf16
                        pltpu.VMEM((N, D), jnp.float32)],   # residual + MLP accumulator
        compiler_params=pltpu.CompilerParams(
            dimension_semantics=("parallel", "arbitrary"),
            vmem_limit_bytes=vmem_limit),
    )(*args)


# ----------------------------------------------------------------------------
# Full encoder forward
# ----------------------------------------------------------------------------
def mae_vit_encoder_forward(x, pos_embed, params, num_heads, *,
                            token_align=8, mlp_chunk=None):
    blocks = params['blocks']
    assert len(blocks) >= 1, "depth must be >= 1 (final LN is fused into last block)"
    B, L, P = x.shape
    D = params['patch_w_t'].shape[1]
    n_real = L + 1                                      # cls token + patches
    n_pad = _round_up(n_real, max(1, token_align))      # sublane-aligned token count
    vmem_limit = _vmem_limit_bytes()

    h = patch_embed_call(x, params['patch_w_t'], params['patch_b'],
                         params['cls_token'], pos_embed, n_pad, vmem_limit)
    final_norm = (params['norm_g'], params['norm_b'])
    for i, bp in enumerate(blocks):
        is_last = (i == len(blocks) - 1)
        h = transformer_block_call(h, bp, num_heads, n_real,
                                   final_norm=final_norm if is_last else None,
                                   mlp_chunk=mlp_chunk, vmem_limit=vmem_limit)
    return h[:, :n_real, :]                             # strip padding; head = Identity


# ----------------------------------------------------------------------------
# Deterministic parameter init (matching the module's __init__ semantics)
# ----------------------------------------------------------------------------
def _xavier_uniform(key, out_dim, in_dim):
    bound = float(np.sqrt(6.0 / (in_dim + out_dim)))
    return jax.random.uniform(key, (out_dim, in_dim), jnp.float32, -bound, bound)


def init_params(key, patch_dim, embed_dim, depth, mlp_ratio):
    keys = jax.random.split(key, 2 + depth)
    hidden = int(embed_dim * mlp_ratio)
    bf16 = jnp.bfloat16
    params = {
        # patch_embed.proj: xavier_uniform weight, zero bias; pre-transposed (P, D) bf16
        'patch_w_t': _xavier_uniform(keys[0], embed_dim, patch_dim).T.astype(bf16),
        'patch_b': jnp.zeros((1, embed_dim), jnp.float32),
        # cls_token ~ N(0, 0.02)
        'cls_token': 0.02 * jax.random.normal(keys[1], (1, embed_dim), jnp.float32),
        'norm_g': jnp.ones((1, embed_dim), jnp.float32),
        'norm_b': jnp.zeros((1, embed_dim), jnp.float32),
    }
    blocks = []
    for i in range(depth):
        bk = jax.random.split(keys[2 + i], 4)
        blocks.append(dict(
            norm1_g=jnp.ones((1, embed_dim), jnp.float32),
            norm1_b=jnp.zeros((1, embed_dim), jnp.float32),
            qkv_w_t=_xavier_uniform(bk[0], 3 * embed_dim, embed_dim).T.astype(bf16),
            qkv_b=jnp.zeros((1, 3 * embed_dim), jnp.float32),
            proj_w_t=_xavier_uniform(bk[1], embed_dim, embed_dim).T.astype(bf16),
            proj_b=jnp.zeros((1, embed_dim), jnp.float32),
            norm2_g=jnp.ones((1, embed_dim), jnp.float32),
            norm2_b=jnp.zeros((1, embed_dim), jnp.float32),
            fc1_w_t=_xavier_uniform(bk[2], hidden, embed_dim).T.astype(bf16),
            fc1_b=jnp.zeros((1, hidden), jnp.float32),
            fc2_w_t=_xavier_uniform(bk[3], embed_dim, hidden).T.astype(bf16),
            fc2_b=jnp.zeros((1, embed_dim), jnp.float32),
        ))
    params['blocks'] = blocks
    return params


# ----------------------------------------------------------------------------
# Pure-JAX reference (identical bf16 cast points, f32 accumulation) for checks
# ----------------------------------------------------------------------------
def reference_forward(x, pos_embed, params, num_heads):
    f32, bf16 = jnp.float32, jnp.bfloat16
    B, L, _ = x.shape
    D = params['norm_g'].shape[-1]
    emb = jnp.einsum('blp,pd->bld', x.astype(bf16), params['patch_w_t'],
                     preferred_element_type=f32) + params['patch_b']
    emb = emb + pos_embed
    cls = jnp.broadcast_to(params['cls_token'][None], (B, 1, D))
    h = jnp.concatenate([cls, emb], axis=1)
    N = L + 1
    dh = D // num_heads
    scale = dh ** -0.5
    for bp in params['blocks']:
        xn = _layernorm(h, bp['norm1_g'], bp['norm1_b'])
        qkv = jnp.einsum('bnd,de->bne', xn.astype(bf16), bp['qkv_w_t'],
                         preferred_element_type=f32) + bp['qkv_b']
        qkv = qkv.astype(bf16)
        q, k, v = qkv[..., :D], qkv[..., D:2 * D], qkv[..., 2 * D:]
        q = q.reshape(B, N, num_heads, dh)
        k = k.reshape(B, N, num_heads, dh)
        v = v.reshape(B, N, num_heads, dh)
        s = jnp.einsum('bqhd,bkhd->bhqk', q, k, preferred_element_type=f32) * scale
        s = s - jnp.max(s, axis=-1, keepdims=True)
        p = jnp.exp(s)
        p = p / jnp.sum(p, axis=-1, keepdims=True)
        o = jnp.einsum('bhqk,bkhd->bqhd', p.astype(bf16), v,
                       preferred_element_type=f32).reshape(B, N, D)
        attn = jnp.einsum('bnd,de->bne', o.astype(bf16), bp['proj_w_t'],
                          preferred_element_type=f32) + bp['proj_b']
        h = h + attn
        xn2 = _layernorm(h, bp['norm2_g'], bp['norm2_b']).astype(bf16)
        h1 = jnp.einsum('bnk,kh->bnh', xn2, bp['fc1_w_t'],
                        preferred_element_type=f32) + bp['fc1_b']
        h1 = jax.nn.gelu(h1, approximate=False)
        mlp = jnp.einsum('bnh,hd->bnd', h1.astype(bf16), bp['fc2_w_t'],
                         preferred_element_type=f32) + bp['fc2_b']
        h = h + mlp
    return _layernorm(h, params['norm_g'], params['norm_b'])


# ----------------------------------------------------------------------------
if __name__ == "__main__":
    # Small but lane-friendly shapes: B=2, L=8 patch tokens (N=9 real, padded
    # to 16), P=48 flattened patch voxels, embed_dim=128 (multiple of 128),
    # heads=4, depth=2, mlp_ratio=4 -> hidden=512, MLP streamed in 2 chunks of
    # 256 to exercise the chunked-accumulation path.
    B, L, P, D, H, DEPTH = 2, 8, 48, 128, 4, 2

    key = jax.random.PRNGKey(0)
    k_x, k_pe, k_p = jax.random.split(key, 3)
    x = jax.random.normal(k_x, (B, L, P), jnp.float32)
    pos_embed = 0.02 * jax.random.normal(k_pe, (1, L, D), jnp.float32)
    params = init_params(k_p, P, D, DEPTH, 4.0)

    out = mae_vit_encoder_forward(x, pos_embed, params, H,
                                  token_align=8, mlp_chunk=256)
    out = jax.block_until_ready(out)

    ref = reference_forward(x, pos_embed, params, H)
    assert out.shape == (B, L + 1, D), out.shape
    # bf16 matmul operands (same cast points in both) + approx softmax
    # reciprocal in the kernel -> bf16-appropriate tolerances.
    np.testing.assert_allclose(np.asarray(out), np.asarray(ref), rtol=2e-2, atol=2e-2)
    print("KERNEL_OK")
</pallas_src>

<mosaic_0001>
module attributes {stable_mosaic.version = 11 : i64} {
  func.func @_embed_kernel(%arg0: i32, %arg1: memref<1x8x48xf32, #tpu.memory_space<vmem>>, %arg2: memref<48x128xbf16, #tpu.memory_space<vmem>>, %arg3: memref<1x128xf32, #tpu.memory_space<vmem>>, %arg4: memref<1x128xf32, #tpu.memory_space<vmem>>, %arg5: memref<1x8x128xf32, #tpu.memory_space<vmem>>, %arg6: memref<1x16x128xf32, #tpu.memory_space<vmem>>) attributes {dimension_semantics = [#tpu.dimension_semantics<parallel>], iteration_bounds = array<i64: 2>, scalar_prefetch = 0 : i64, scratch_operands = 0 : i64, tpu.core_type = #tpu.core_type<tc>, window_params = [{transform_indices = @transform_0, window_bounds = array<i64: 1, 8, 48>}, {pipeline_mode = #tpu.pipeline_mode<synchronous>, transform_indices = @transform_1, window_bounds = array<i64: 48, 128>}, {pipeline_mode = #tpu.pipeline_mode<synchronous>, transform_indices = @transform_2, window_bounds = array<i64: 1, 128>}, {pipeline_mode = #tpu.pipeline_mode<synchronous>, transform_indices = @transform_3, window_bounds = array<i64: 1, 128>}, {pipeline_mode = #tpu.pipeline_mode<synchronous>, transform_indices = @transform_4, window_bounds = array<i64: 1, 8, 128>}, {transform_indices = @transform_5, window_bounds = array<i64: 1, 16, 128>}]} {
    %c0 = arith.constant 0 : index
    %c0_0 = arith.constant 0 : index
    %c0_1 = arith.constant 0 : index
    %0 = vector.load %arg1[%c0, %c0_0, %c0_1] : memref<1x8x48xf32, #tpu.memory_space<vmem>>, vector<1x8x48xf32>
    %1 = vector.shape_cast %0 : vector<1x8x48xf32> to vector<8x48xf32>
    %2 = arith.truncf %1 : vector<8x48xf32> to vector<8x48xbf16>
    %c0_2 = arith.constant 0 : index
    %c0_3 = arith.constant 0 : index
    %3 = vector.load %arg2[%c0_2, %c0_3] : memref<48x128xbf16, #tpu.memory_space<vmem>>, vector<48x128xbf16>
    %cst = arith.constant dense<0.000000e+00> : vector<8x128xf32>
    %4 = tpu.matmul %2, %3, %cst {dimension_numbers = #tpu.dot_dimension_numbers<[1], [0], [0], [1], [0, 0, 1, 1], [], []>} : vector<8x48xbf16>, vector<48x128xbf16>, vector<8x128xf32> -> vector<8x128xf32>
    %c0_4 = arith.constant 0 : index
    %c0_5 = arith.constant 0 : index
    %5 = vector.load %arg3[%c0_4, %c0_5] : memref<1x128xf32, #tpu.memory_space<vmem>>, vector<1x128xf32>
    %6 = vector.broadcast %5 : vector<1x128xf32> to vector<8x128xf32>
    %7 = arith.addf %4, %6 : vector<8x128xf32>
    %c0_6 = arith.constant 0 : index
    %c0_7 = arith.constant 0 : index
    %c0_8 = arith.constant 0 : index
    %8 = vector.load %arg5[%c0_6, %c0_7, %c0_8] : memref<1x8x128xf32, #tpu.memory_space<vmem>>, vector<1x8x128xf32>
    %9 = vector.shape_cast %8 : vector<1x8x128xf32> to vector<8x128xf32>
    %10 = arith.addf %7, %9 : vector<8x128xf32>
    %c0_9 = arith.constant 0 : index
    %c0_10 = arith.constant 0 : index
    %11 = vector.load %arg4[%c0_9, %c0_10] : memref<1x128xf32, #tpu.memory_space<vmem>>, vector<1x128xf32>
    %c0_11 = arith.constant 0 : index
    %c0_12 = arith.constant 0 : index
    %c0_13 = arith.constant 0 : index
    %12 = vector.load %arg6[%c0_11, %c0_12, %c0_13] : memref<1x16x128xf32, #tpu.memory_space<vmem>>, vector<1x1x128xf32>
    %13 = vector.shape_cast %12 : vector<1x1x128xf32> to vector<1x128xf32>
    %14 = vector.shape_cast %11 : vector<1x128xf32> to vector<1x1x128xf32>
    tpu.vector_store %arg6[%c0_11, %c0_12, %c0_13], %14 {strides = array<i32>} : memref<1x16x128xf32, #tpu.memory_space<vmem>>, vector<1x1x128xf32>,
    %c0_14 = arith.constant 0 : index
    %c1 = arith.constant 1 : index
    %c0_15 = arith.constant 0 : index
    %15 = vector.load %arg6[%c0_14, %c1, %c0_15] : memref<1x16x128xf32, #tpu.memory_space<vmem>>, vector<1x8x128xf32>
    %16 = vector.shape_cast %15 : vector<1x8x128xf32> to vector<8x128xf32>
    %17 = vector.shape_cast %10 : vector<8x128xf32> to vector<1x8x128xf32>
    tpu.vector_store %arg6[%c0_14, %c1, %c0_15], %17 {strides = array<i32>} : memref<1x16x128xf32, #tpu.memory_space<vmem>>, vector<1x8x128xf32>,
    %cst_16 = arith.constant 0.000000e+00 : f32
    %18 = vector.broadcast %cst_16 : f32 to vector<7x128xf32>
    %c0_17 = arith.constant 0 : index
    %c9 = arith.constant 9 : index
    %c0_18 = arith.constant 0 : index
    %19 = vector.load %arg6[%c0_17, %c9, %c0_18] : memref<1x16x128xf32, #tpu.memory_space<vmem>>, vector<1x7x128xf32>
    %20 = vector.shape_cast %19 : vector<1x7x128xf32> to vector<7x128xf32>
    %21 = vector.shape_cast %18 : vector<7x128xf32> to vector<1x7x128xf32>
    tpu.vector_store %arg6[%c0_17, %c9, %c0_18], %21 {strides = array<i32>} : memref<1x16x128xf32, #tpu.memory_space<vmem>>, vector<1x7x128xf32>,
    return
  }
  func.func @transform_0(%arg0: i32) -> (i32, i32, i32) {
    %c0_i32 = arith.constant 0 : i32
    %c0_i32_0 = arith.constant 0 : i32
    %c0_i32_1 = arith.constant 0 : i32
    return %arg0, %c0_i32, %c0_i32_0 : i32, i32, i32
  }
  func.func @transform_1(%arg0: i32) -> (i32, i32) {
    %c0_i32 = arith.constant 0 : i32
    %c0_i32_0 = arith.constant 0 : i32
    %c0_i32_1 = arith.constant 0 : i32
    return %c0_i32, %c0_i32_0 : i32, i32
  }
  func.func @transform_2(%arg0: i32) -> (i32, i32) {
    %c0_i32 = arith.constant 0 : i32
    %c0_i32_0 = arith.constant 0 : i32
    %c0_i32_1 = arith.constant 0 : i32
    return %c0_i32, %c0_i32_0 : i32, i32
  }
  func.func @transform_3(%arg0: i32) -> (i32, i32) {
    %c0_i32 = arith.constant 0 : i32
    %c0_i32_0 = arith.constant 0 : i32
    %c0_i32_1 = arith.constant 0 : i32
    return %c0_i32, %c0_i32_0 : i32, i32
  }
  func.func @transform_4(%arg0: i32) -> (i32, i32, i32) {
    %c0_i32 = arith.constant 0 : i32
    %c0_i32_0 = arith.constant 0 : i32
    %c0_i32_1 = arith.constant 0 : i32
    %c0_i32_2 = arith.constant 0 : i32
    return %c0_i32, %c0_i32_0, %c0_i32_1 : i32, i32, i32
  }
  func.func @transform_5(%arg0: i32) -> (i32, i32, i32) {
    %c0_i32 = arith.constant 0 : i32
    %c0_i32_0 = arith.constant 0 : i32
    %c0_i32_1 = arith.constant 0 : i32
    return %arg0, %c0_i32, %c0_i32_0 : i32, i32, i32
  }
}

</mosaic_0001>

<llo_original>
// kernel: tpu_custom_call.1
$region0: #{tpu_custom_call.1}
  #allocation0 [shape = 'u32[]', space=smem, size = 0x4, offset = 0x4, fixed_abs, tag = 'smem constant byte address 0x4 - core index']
  #allocation1 [shape = 'u32[144,128]{1,0:T(1,128)}', space=vmem, size = 0x12000, scoped, tag = 'internal scratch']
  %s0 = inlined_call_operand.hbm [shape: f32[2,8,48], index: 0, kind: input, shape index: {}]
  %s1 = inlined_call_operand.hbm [shape: bf16[48,128], index: 1, kind: input, shape index: {}]
  %s2 = inlined_call_operand.vmem [shape: f32[1,128], index: 2, kind: input, shape index: {}]
  %s3 = inlined_call_operand.vmem [shape: f32[1,128], index: 3, kind: input, shape index: {}]
  %s4 = inlined_call_operand.vmem [shape: f32[1,8,128], index: 4, kind: input, shape index: {}]
  %s5 = inlined_call_operand.hbm [shape: f32[2,16,128], index: 5, kind: output, shape index: {}]
  %s6 = sld [smem:[#allocation0]]
  $region61: #{tpu_custom_call.1} parent=0
    _
  %s8 = ssub.s32 1, %s6
  %s9 = scalar_select 0, %s8, %s6
  $region1: #{tpu_custom_call.1} parent=0
    #allocation2 [shape = 'u8[8192]{0}', space=vmem, size = 0x2000, scoped, tag = 'input window, operand 0']
    #allocation3 [shape = 's32[2]{0}', space=sflag, size = 0x8, scoped, tag = 'scoped memory for tpu_custom_call.1']
    #allocation4 [shape = 's32[2]{0}', space=sflag, size = 0x8, scoped, tag = 'scoped memory for tpu_custom_call.1']
    #allocation5 [shape = 'u8[12288]{0}', space=vmem, size = 0x3000, scoped, tag = 'input window, operand 1, single buffered']
    #allocation6 [shape = 's32[1]{0}', space=sflag, size = 0x4, scoped, tag = 'scoped memory for tpu_custom_call.1']
    #allocation7 [shape = 'u8[16384]{0}', space=vmem, size = 0x4000, scoped, tag = 'output window, operand 0']
    %10 = vsyncpa [#allocation3], 0
    %s11 = scalar_lea.sflag [#allocation3], 1
    %12 = vsyncpa %s11, 0
    %13 = vsyncpa [#allocation6], 0
    %14 = vsyncpa [#allocation4], 0
    %s15 = scalar_lea.sflag [#allocation4], 1
    %16 = vsyncpa %s15, 0
    loop: start=0, step=1, limit=4
    $region2: #{tpu_custom_call.1} parent=1 // loop_pre_header
      _
    $region3: #{tpu_custom_call.1} parent=1 // loop_header
      %s18 = sphi 0, %s22
      %p19 = scmp.ge.s32.totalorder %s18, 4
      %s28 = sphi 0, %s30
      %s31 = sphi 0, %s28
      %s32 = sphi 0, %s31
      %s48 = sphi 0, %s32
      %s52 = sphi 0, %s52
      %s54 = sphi 0, %s52
      %s55 = sphi 0, %s54
      %s69 = sphi 0, %s55
      %s73 = sphi 0, %s73
      %s75 = sphi 0, %s73
      %s76 = sphi 0, %s75
      %s90 = sphi 0, %s76
      %s94 = sphi 0, %s94
      %s96 = sphi 0, %s94
      %s97 = sphi 0, %s96
      %s111 = sphi 0, %s97
      %s115 = sphi 0, %s115
      %s117 = sphi 0, %s115
      %s118 = sphi 0, %s117
      %s132 = sphi 0, %s118
      %s138 = sphi 0, %s140
      %s141 = sphi 0, %s138
      %s142 = sphi 0, %s141
      %s158 = sphi 0, %s142
    $region4: #{tpu_custom_call.1} parent=1 // loop_header_branch
      %21 = sbr.rel (%p19) target = $region8
    $region5: #{tpu_custom_call.1} parent=1 // loop_body
      %s23 = ssub.s32 %s18, 1
      %s24 = ssub.s32 %s18, 2
      %s25 = sadd.s32 %s18, 1
      %s26 = ssub.s32 %s18, %s25
      %p27 = scmp.eq.s32.totalorder %s26, 0
      %s29 = sadd.s32 %s28, 1
      %s30 = scalar_select %p27, %s28, %s29
      %p33 = pneg %p27
      %p34 = scmp.eq.s32.totalorder %s18, 1
      %p35 = por %p33, %p34
      %p36 = scmp.ne.s32.totalorder %s28, %s31
      %p37 = scmp.eq.s32.totalorder %s18, 0
      %p38 = por %p36, %p37
      %p39 = scmp.ne.s32.totalorder %s28, %s31
      %p40 = scmp.eq.s32.totalorder %s23, 1
      %p41 = por %p39, %p40
      %p42 = scmp.ne.s32.totalorder %s31, %s32
      %p43 = scmp.eq.s32.totalorder %s23, 0
      %p44 = por %p42, %p43
      %p45 = scmp.ne.s32.totalorder %s31, %s32
      %p46 = scmp.eq.s32.totalorder %s24, 1
      %p47 = por %p45, %p46
      %p49 = scmp.ne.s32.totalorder %s32, %s48
      %p50 = scmp.eq.s32.totalorder %s24, 0
      %p51 = por %p49, %p50
      %s53 = sadd.s32 %s52, 1
      %p56 = scmp.eq.s32.totalorder %s18, 1
      %p57 = scmp.ne.s32.totalorder %s52, %s54
      %p58 = scmp.eq.s32.totalorder %s18, 0
      %p59 = por %p57, %p58
      %p60 = scmp.ne.s32.totalorder %s52, %s54
      %p61 = scmp.eq.s32.totalorder %s23, 1
      %p62 = por %p60, %p61
      %p63 = scmp.ne.s32.totalorder %s54, %s55
      %p64 = scmp.eq.s32.totalorder %s23, 0
      %p65 = por %p63, %p64
      %p66 = scmp.ne.s32.totalorder %s54, %s55
      %p67 = scmp.eq.s32.totalorder %s24, 1
      %p68 = por %p66, %p67
      %p70 = scmp.ne.s32.totalorder %s55, %s69
      %p71 = scmp.eq.s32.totalorder %s24, 0
      %p72 = por %p70, %p71
      %s74 = sadd.s32 %s73, 1
      %p77 = scmp.eq.s32.totalorder %s18, 1
      %p78 = scmp.ne.s32.totalorder %s73, %s75
      %p79 = scmp.eq.s32.totalorder %s18, 0
      %p80 = por %p78, %p79
      %p81 = scmp.ne.s32.totalorder %s73, %s75
      %p82 = scmp.eq.s32.totalorder %s23, 1
      %p83 = por %p81, %p82
      %p84 = scmp.ne.s32.totalorder %s75, %s76
      %p85 = scmp.eq.s32.totalorder %s23, 0
      %p86 = por %p84, %p85
      %p87 = scmp.ne.s32.totalorder %s75, %s76
      %p88 = scmp.eq.s32.totalorder %s24, 1
      %p89 = por %p87, %p88
      %p91 = scmp.ne.s32.totalorder %s76, %s90
      %p92 = scmp.eq.s32.totalorder %s24, 0
      %p93 = por %p91, %p92
      %s95 = sadd.s32 %s94, 1
      %p98 = scmp.eq.s32.totalorder %s18, 1
      %p99 = scmp.ne.s32.totalorder %s94, %s96
      %p100 = scmp.eq.s32.totalorder %s18, 0
      %p101 = por %p99, %p100
      %p102 = scmp.ne.s32.totalorder %s94, %s96
      %p103 = scmp.eq.s32.totalorder %s23, 1
      %p104 = por %p102, %p103
      %p105 = scmp.ne.s32.totalorder %s96, %s97
      %p106 = scmp.eq.s32.totalorder %s23, 0
      %p107 = por %p105, %p106
      %p108 = scmp.ne.s32.totalorder %s96, %s97
      %p109 = scmp.eq.s32.totalorder %s24, 1
      %p110 = por %p108, %p109
      %p112 = scmp.ne.s32.totalorder %s97, %s111
      %p113 = scmp.eq.s32.totalorder %s24, 0
      %p114 = por %p112, %p113
      %s116 = sadd.s32 %s115, 1
      %p119 = scmp.eq.s32.totalorder %s18, 1
      %p120 = scmp.ne.s32.totalorder %s115, %s117
      %p121 = scmp.eq.s32.totalorder %s18, 0
      %p122 = por %p120, %p121
      %p123 = scmp.ne.s32.totalorder %s115, %s117
      %p124 = scmp.eq.s32.totalorder %s23, 1
      %p125 = por %p123, %p124
      %p126 = scmp.ne.s32.totalorder %s117, %s118
      %p127 = scmp.eq.s32.totalorder %s23, 0
      %p128 = por %p126, %p127
      %p129 = scmp.ne.s32.totalorder %s117, %s118
      %p130 = scmp.eq.s32.totalorder %s24, 1
      %p131 = por %p129, %p130
      %p133 = scmp.ne.s32.totalorder %s118, %s132
      %p134 = scmp.eq.s32.totalorder %s24, 0
      %p135 = por %p133, %p134
      %s136 = ssub.s32 %s18, %s25
      %p137 = scmp.eq.s32.totalorder %s136, 0
      %s139 = sadd.s32 %s138, 1
      %s140 = scalar_select %p137, %s138, %s139
      %p143 = pneg %p137
      %p144 = scmp.eq.s32.totalorder %s18, 1
      %p145 = por %p143, %p144
      %p146 = scmp.ne.s32.totalorder %s138, %s141
      %p147 = scmp.eq.s32.totalorder %s18, 0
      %p148 = por %p146, %p147
      %p149 = scmp.ne.s32.totalorder %s138, %s141
      %p150 = scmp.eq.s32.totalorder %s23, 1
      %p151 = por %p149, %p150
      %p152 = scmp.ne.s32.totalorder %s141, %s142
      %p153 = scmp.eq.s32.totalorder %s23, 0
      %p154 = por %p152, %p153
      %p155 = scmp.ne.s32.totalorder %s141, %s142
      %p156 = scmp.eq.s32.totalorder %s24, 1
      %p157 = por %p155, %p156
      %p159 = scmp.ne.s32.totalorder %s142, %s158
      %p160 = scmp.eq.s32.totalorder %s24, 0
      %p161 = por %p159, %p160
      %p162 = scmp.le.s32.totalorder 1, %s18
      %p163 = scmp.lt.s32.totalorder %s18, 3
      %p164 = pnand %p162, %p163
      %p165 = pneg %p164
      // Predicated region
      $region9: #{tpu_custom_call.1} parent=5 // pred_check
        _
      $region10: #{tpu_custom_call.1} parent=5 // pred_check_branch
        %167 = sbr.rel (%p164) target = $region12
      $region11: #{tpu_custom_call.1} parent=5 // pred_region
        %s168 = ssub.s32 %s18, 1
        // Predicated region
        $region13: #{tpu_custom_call.1} parent=11 // pred_check
          %p169 = pneg %p65
        $region14: #{tpu_custom_call.1} parent=11 // pred_check_branch
          %171 = sbr.rel (%p169) target = $region16
        $region15: #{tpu_custom_call.1} parent=11 // pred_region
          %s173 = ssub.s32 384, 384
          %174 = vsyncadd [#allocation6], %s173
          %s175 = sshll.u32 [#allocation5], 4
          %s176 = int_to_ptr.vmem [resolvable:$true] %s175
          %181 = dma.hbm_to_vmem [thread:$0]  %s1, 384, %s176, [#allocation6], 64, 64, 4
        $region16: #{tpu_custom_call.1} parent=11 // pred_fallthru
          _
        // Predicated region
        $region17: #{tpu_custom_call.1} parent=11 // pred_check
          %p182 = pneg %p86
        $region18: #{tpu_custom_call.1} parent=11 // pred_check_branch
          %184 = sbr.rel (%p182) target = $region20
        $region19: #{tpu_custom_call.1} parent=11 // pred_region
          _
        $region20: #{tpu_custom_call.1} parent=11 // pred_fallthru
          _
        // Predicated region
        $region21: #{tpu_custom_call.1} parent=11 // pred_check
          %p185 = pneg %p107
        $region22: #{tpu_custom_call.1} parent=11 // pred_check_branch
          %187 = sbr.rel (%p185) target = $region24
        $region23: #{tpu_custom_call.1} parent=11 // pred_region
          _
        $region24: #{tpu_custom_call.1} parent=11 // pred_fallthru
          _
        // Predicated region
        $region25: #{tpu_custom_call.1} parent=11 // pred_check
          %p188 = pneg %p128
        $region26: #{tpu_custom_call.1} parent=11 // pred_check_branch
          %190 = sbr.rel (%p188) target = $region28
        $region27: #{tpu_custom_call.1} parent=11 // pred_region
          _
        $region28: #{tpu_custom_call.1} parent=11 // pred_fallthru
          _
      $region12: #{tpu_custom_call.1} parent=5 // pred_fallthru
        _
      %p191 = scmp.lt.s32.totalorder %s18, 2
      // Predicated region
      $region29: #{tpu_custom_call.1} parent=5 // pred_check
        %p192 = pneg %p191
      $region30: #{tpu_custom_call.1} parent=5 // pred_check_branch
        %194 = sbr.rel (%p192) target = $region32
      $region31: #{tpu_custom_call.1} parent=5 // pred_region
        // Predicated region
        $region33: #{tpu_custom_call.1} parent=31 // pred_check
          %p195 = pneg %p38
        $region34: #{tpu_custom_call.1} parent=31 // pred_check_branch
          %197 = sbr.rel (%p195) target = $region36
        $region35: #{tpu_custom_call.1} parent=31 // pred_region
          %s198 = sand.u32 %s28, 1
          %s199 = scalar_lea.sflag [#allocation3], %s198
          %s200 = sand.u32 %s28, 1
          %s201 = smul.addr %s200, 8
          %s202 = scalar_lea.vmem [#allocation2], %s201
          %s204 = ssub.s32 128, 128
          %205 = vsyncadd %s199, %s204
          %s206 = smul.addr %s18, 128
          %s207 = scalar_lea.hbm %s0, %s206
          %s209 = sshll.u32 %s202, 4
          %s210 = int_to_ptr.vmem [resolvable:$true] %s209
          %212 = dma.hbm_to_vmem [thread:$0]  %s207, 128, %s210, %s199
        $region36: #{tpu_custom_call.1} parent=31 // pred_fallthru
          _
      $region32: #{tpu_custom_call.1} parent=5 // pred_fallthru
        _
      %p213 = scmp.le.s32.totalorder 1, %s18
      %p214 = scmp.lt.s32.totalorder %s18, 3
      %p215 = pnand %p213, %p214
      %p216 = pneg %p215
      // Predicated region
      $region37: #{tpu_custom_call.1} parent=5 // pred_check
        _
      $region38: #{tpu_custom_call.1} parent=5 // pred_check_branch
        %218 = sbr.rel (%p215) target = $region40
      $region39: #{tpu_custom_call.1} parent=5 // pred_region
        %s219 = ssub.s32 %s18, 1
        %s220 = sand.u32 %s31, 1
        %s221 = scalar_lea.sflag [#allocation3], %s220
        %s222 = sand.u32 %s31, 1
        %s223 = smul.addr %s222, 8
        %s224 = scalar_lea.vmem [#allocation2], %s223
        // Predicated region
        $region41: #{tpu_custom_call.1} parent=39 // pred_check
          %p225 = pneg %p44
        $region42: #{tpu_custom_call.1} parent=39 // pred_check_branch
          %227 = sbr.rel (%p225) target = $region44
        $region43: #{tpu_custom_call.1} parent=39 // pred_region
          %228 = dma.done %s221, 128
        $region44: #{tpu_custom_call.1} parent=39 // pred_fallthru
          _
        // Predicated region
        $region45: #{tpu_custom_call.1} parent=39 // pred_check
          %p229 = pneg %p65
        $region46: #{tpu_custom_call.1} parent=39 // pred_check_branch
          %231 = sbr.rel (%p229) target = $region48
        $region47: #{tpu_custom_call.1} parent=39 // pred_region
          %232 = dma.done [#allocation6], 384
        $region48: #{tpu_custom_call.1} parent=39 // pred_fallthru
          _
        %s233 = sand.u32 %s31, 1
        %s234 = scalar_lea.sflag [#allocation3], %s233
        %s235 = sand.u32 %s31, 1
        %s236 = smul.addr %s235, 8
        %s237 = scalar_lea.vmem [#allocation2], %s236
        %p238 = pneg %p44
        %p239 = pneg %p41
        %p240 = pneg %p65
        %p241 = pneg %p62
        %p242 = pneg %p86
        %p243 = pneg %p83
        %p244 = pneg %p107
        %p245 = pneg %p104
        %p246 = pneg %p128
        %p247 = pneg %p125
        %p248 = pneg %p154
        %p249 = pneg %p151
        %s250 = sand.u32 %s141, 1
        %s251 = scalar_lea.sflag [#allocation4], %s250
        %s252 = sand.u32 %s141, 1
        %s253 = smul.addr %s252, 16
        %s254 = scalar_lea.vmem [#allocation7], %s253
        %v256 = vld [vmem:[%s224] sm:$0xff]
        %v257 = vpack.c.bf16 %v256, %v256
        %v258 = vld [vmem:[#allocation5] sm:$0xf]
        %v259 = vld [vmem:[#allocation5 + $0x4] sm:$0xf]
        %v260 = vld [vmem:[#allocation5 + $0x8] sm:$0xf]
        %v261 = vld [vmem:[#allocation5 + $0xc] sm:$0xf]
        %v262 = vld [vmem:[#allocation5 + $0x10] sm:$0xf]
        %v263 = vld [vmem:[#allocation5 + $0x14] sm:$0xf]
        %v264 = vld [vmem:[%s2] sm:$0x1]
        %v266 = vlaneseq
        %v267 = vshrl.u32 %v266, 7
        %v268 = vsub.s32 0, %v267
        %v269 = vrot.slane %v264, %v268
        %v277 = vunpack.c.l.b16 %v258
        %v278 = vunpack.c.l.b16 %v259
        %v279 = vunpack.c.l.b16 %v260
        %v280 = vunpack.c.l.b16 %v261
        %v281 = vunpack.c.l.b16 %v262
        %v282 = vunpack.c.l.b16 %v263
        %v283 = vpack.c.b16 %v278, %v277
        %v284 = vpack.c.b16 %v280, %v279
        %v285 = vpack.c.b16 %v282, %v281
        %vm289 = vcmask 392192
        %v291 = vsel %vm289, %v257, 0
        %293 = vmatprep.subr.bf16.mxu0 0
        %294 = vmatpush1.bf16.msra.mxu0 %v283
        %295 = vmatprep.subr.bf16.mxu0 0
        %296 = vmatpush1.bf16.msra.mxu0 %v284
        %297 = vmatprep.subr.bf16.mxu0 0
        %298 = vmatpush1.bf16.msra.mxu0 %v285
        %299 = vmatprep.subr.bf16.mxu0 0
        %300 = vmatpush1.bf16.msra.mxu0 0
        %301 = vmatprep.subr.bf16.mxu0 0
        %302 = vmatpush1.bf16.msra.mxu0 0
        %303 = vmatprep.subr.bf16.mxu0 0
        %304 = vmatpush1.bf16.msra.mxu0 0
        %305 = vmatprep.subr.bf16.mxu0 0
        %306 = vmatpush1.bf16.msra.mxu0 0
        %307 = vmatprep.subr.bf16.mxu0 0
        %308 = vmatpush1.bf16.msra.mxu0 0
        %309 = vmatprep.subr.bf16.mxu0 0
        %310 = vmatpush1.bf16.msra.mxu0 0
        %311 = vmatprep.subr.bf16.mxu0 0
        %312 = vmatpush1.bf16.msra.mxu0 0
        %313 = vmatprep.subr.bf16.mxu0 0
        %314 = vmatpush1.bf16.msra.mxu0 0
        %315 = vmatprep.subr.bf16.mxu0 0
        %316 = vmatpush1.bf16.msra.mxu0 0
        %317 = vmatprep.subr.bf16.mxu0 0
        %318 = vmatpush1.bf16.msra.mxu0 0
        %319 = vmatprep.subr.bf16.mxu0 0
        %320 = vmatpush1.bf16.msra.mxu0 0
        %321 = vmatprep.subr.bf16.mxu0 0
        %322 = vmatpush1.bf16.msra.mxu0 0
        %323 = vmatprep.subr.bf16.mxu0 0
        %324 = vmatpush1.bf16.msra.mxu0 0
        %325 = vmatprep.mubr.bf16.mxu0 0
        %326 = vmatmul.mubr.bf16.gmra.mrb[0].mxu0 %v291
        %v327 = vpop.f32.mrb[0].mxu0
        %v328 = vadd.f32 %v269, %v327
        %v329 = vpop.f32.mrb[0].mxu0
        %v330 = vpop.f32.mrb[0].mxu0
        %v331 = vpop.f32.mrb[0].mxu0
        %332 = vdwg.mxu0
        %v333 = vld [vmem:[%s4] sm:$0xff]
        %v334 = vadd.f32 %v328, %v333
        %v335 = vld [vmem:[%s3] sm:$0x1]
        %336 = vst [vmem:[%s254] sm:$0x1] %v335
        %337 = vst [vmem:[%s254 + $0x1] sm:$0xff] %v334
        %338 = vst [vmem:[%s254 + $0x9] sm:$0x7f] 0.0
        %s339 = sand.u32 %s141, 1
        %s340 = scalar_lea.sflag [#allocation4], %s339
        %s341 = sand.u32 %s141, 1
        %s342 = smul.addr %s341, 16
        %s343 = scalar_lea.vmem [#allocation7], %s342
        // Predicated region
        $region49: #{tpu_custom_call.1} parent=39 // pred_check
          %p344 = pneg %p151
        $region50: #{tpu_custom_call.1} parent=39 // pred_check_branch
          %346 = sbr.rel (%p344) target = $region52
        $region51: #{tpu_custom_call.1} parent=39 // pred_region
          %s348 = ssub.s32 256, 256
          %349 = vsyncadd %s340, %s348
          %s350 = smul.addr %s23, 2
          %s351 = smul.addr %s350, 128
          %s352 = scalar_lea.hbm %s5, %s351
          %s353 = sshll.u32 %s343, 4
          %s354 = int_to_ptr.vmem [resolvable:$true] %s353
          %359 = dma.vmem_to_hbm [thread:$0]  %s354, 256, %s352, %s340, 128, 128, 8
        $region52: #{tpu_custom_call.1} parent=39 // pred_fallthru
          _
      $region40: #{tpu_custom_call.1} parent=5 // pred_fallthru
        _
      %p360 = scmp.le.s32.totalorder 2, %s18
      // Predicated region
      $region53: #{tpu_custom_call.1} parent=5 // pred_check
        %p361 = pneg %p360
      $region54: #{tpu_custom_call.1} parent=5 // pred_check_branch
        %363 = sbr.rel (%p361) target = $region56
      $region55: #{tpu_custom_call.1} parent=5 // pred_region
        %s364 = ssub.s32 %s18, 2
        // Predicated region
        $region57: #{tpu_custom_call.1} parent=55 // pred_check
          %p365 = pneg %p157
        $region58: #{tpu_custom_call.1} parent=55 // pred_check_branch
          %367 = sbr.rel (%p365) target = $region60
        $region59: #{tpu_custom_call.1} parent=55 // pred_region
          %s368 = sand.u32 %s142, 1
          %s369 = scalar_lea.sflag [#allocation4], %s368
          %s370 = sand.u32 %s142, 1
          %s371 = smul.addr %s370, 16
          %s372 = scalar_lea.vmem [#allocation7], %s371
          %373 = dma.done %s369, 256
        $region60: #{tpu_custom_call.1} parent=55 // pred_fallthru
          _
      $region56: #{tpu_custom_call.1} parent=5 // pred_fallthru
        _
    $region6: #{tpu_custom_call.1} parent=1 // loop_footer
      %s22 = sadd.s32 1, %s18
    $region7: #{tpu_custom_call.1} parent=1 // loop_footer_branch
      %17 = sbr.rel target = $region3
    $region8: #{tpu_custom_call.1} parent=1 // loop_exit
      _
    %374 = vsyncpa [#allocation3], 1
    %s375 = scalar_lea.sflag [#allocation3], 1
    %376 = vsyncpa %s375, 1
    %377 = vsyncpa [#allocation6], 1
    %378 = vsyncpa [#allocation4], 1
    %s379 = scalar_lea.sflag [#allocation4], 1
    %380 = vsyncpa %s379, 1

</llo_original>
